<compile_context>
chip_gen: v7x
topology: tpu7x:2x2x1
jax: 0.10.0
libtpu: 0.0.40
codegen_flags: <defaults>
</compile_context>

<pallas_src>
import functools

import jax
import jax.numpy as jnp
from jax.experimental import pallas as pl
from jax.experimental.pallas import tpu as pltpu


# ---------------------------------------------------------------------------
# Kernels
# ---------------------------------------------------------------------------
def _grad_kernel_wide(img_ref, dx_ref, dy_ref, *, compute_dtype):
    """Layout (tn, H, W): H on sublanes, W (>= 128) on lanes.

    Bulk central differences via XLU rolls; the wrap-around values at the borders
    are overwritten afterwards by static-slice stores (replication padding).
    """
    x = img_ref[...].astype(compute_dtype)
    _, H, W = x.shape

    # ---- d/dx : central difference along W --------------------------------
    xm1 = pltpu.roll(x, shift=1, axis=2)          # x[..., w-1] (wraps at w=0)
    xp1 = pltpu.roll(x, shift=W - 1, axis=2)      # x[..., w+1] (wraps at w=W-1)
    dx_ref[...] = (0.5 * (xp1 - xm1)).astype(dx_ref.dtype)
    # replication-padded edges -> one-sided differences (tiny static stores)
    dx_ref[:, :, 0:1] = (0.5 * (x[:, :, 1:2] - x[:, :, 0:1])).astype(dx_ref.dtype)
    dx_ref[:, :, W - 1:W] = (
        0.5 * (x[:, :, W - 1:W] - x[:, :, W - 2:W - 1])).astype(dx_ref.dtype)

    # ---- d/dy : central difference along H --------------------------------
    if H == 1:
        dy_ref[...] = jnp.zeros_like(dy_ref)      # both replicated neighbors == x
    else:
        ym1 = pltpu.roll(x, shift=1, axis=1)      # x[:, h-1, :]
        yp1 = pltpu.roll(x, shift=H - 1, axis=1)  # x[:, h+1, :]
        dy_ref[...] = (0.5 * (yp1 - ym1)).astype(dy_ref.dtype)
        dy_ref[:, 0:1, :] = (0.5 * (x[:, 1:2, :] - x[:, 0:1, :])).astype(dy_ref.dtype)
        dy_ref[:, H - 1:H, :] = (
            0.5 * (x[:, H - 1:H, :] - x[:, H - 2:H - 1, :])).astype(dy_ref.dtype)


def _grad_kernel_flat(img_ref, dx_ref, dy_ref, *, H, W, compute_dtype):
    """Layout (tn, H*W): whole image flattened onto the lane axis (used when W < 128).

    Keeps every vreg/store lane-dense.  dx needs per-row edge masks (columns 0 and
    W-1 repeat every W lanes); dy edges are simply the first/last W lanes.  Roll
    wrap-around across row seams is neutralized by the same masks.
    """
    x = img_ref[...].astype(compute_dtype)
    P = H * W

    pos = jax.lax.broadcasted_iota(jnp.int32, x.shape, 1)   # flattened pixel index
    if (W & (W - 1)) == 0:            # power-of-two width -> cheap AND, no int mod
        col = pos & (W - 1)
    else:
        col = pos % W

    # ---- d/dx --------------------------------------------------------------
    if W == 1:
        dx_ref[...] = jnp.zeros_like(dx_ref)
    else:
        xm1 = pltpu.roll(x, shift=1, axis=1)       # x[p-1] == x[h, w-1]
        xp1 = pltpu.roll(x, shift=P - 1, axis=1)   # x[p+1] == x[h, w+1]
        left = jnp.where(col == 0, x, xm1)         # replicate left edge
        right = jnp.where(col == W - 1, x, xp1)    # replicate right edge
        dx_ref[...] = (0.5 * (right - left)).astype(dx_ref.dtype)

    # ---- d/dy --------------------------------------------------------------
    if H == 1:
        dy_ref[...] = jnp.zeros_like(dy_ref)
    else:
        ymW = pltpu.roll(x, shift=W, axis=1)       # x[p-W] == x[h-1, w]
        ypW = pltpu.roll(x, shift=P - W, axis=1)   # x[p+W] == x[h+1, w]
        up = jnp.where(pos < W, x, ymW)            # replicate top edge
        down = jnp.where(pos >= P - W, x, ypW)     # replicate bottom edge
        dy_ref[...] = (0.5 * (down - up)).astype(dy_ref.dtype)


# ---------------------------------------------------------------------------
# Hardware-aware sizing helpers
# ---------------------------------------------------------------------------
_TARGET_GRID_STEPS = 8        # >= 2 TensorCores (v7x) x >= 4 pipelined steps each
_MIN_BLOCK_BYTES = 1 << 20    # ~1 MiB blocks sit on the HBM-roofline plateau (~85%)


def _tpu_generation():
    """Best-effort TPU generation from device_kind; 0 if unknown."""
    try:
        kind = jax.devices()[0].device_kind.lower()
    except Exception:
        return 0
    for gen in (7, 6, 5, 4, 3, 2):
        if f"v{gen}" in kind or f"tpu{gen}" in kind:
            return gen
    return 0


def _vmem_capacity_bytes():
    """Physical VMEM per TensorCore.  Conservative in every direction: unknown
    chips are treated like v7x (64 MiB), and a reported capacity never raises
    the table value (it can only lower it)."""
    table = {2: 16, 3: 16, 4: 128, 5: 128, 6: 128}
    cap = table.get(_tpu_generation(), 64) * 1024 * 1024
    try:
        reported = int(getattr(pltpu.get_tpu_info(), "vmem_capacity_bytes", 0))
        if reported > 0:
            cap = min(cap, reported)
    except Exception:
        pass
    return cap


def _choose_tile_n(N, plane_vmem_bytes, block_budget_bytes, round_to=1):
    """Images per block: as many as the VMEM budget allows, shrunk only far enough
    to give ~_TARGET_GRID_STEPS grid steps (pipelining + v7x megacore) and never
    below the ~1 MiB-per-block HBM-roofline floor."""
    plane_vmem_bytes = max(int(plane_vmem_bytes), 1)
    cap = max(1, block_budget_bytes // plane_vmem_bytes)      # hard VMEM cap
    tn = min(N, cap)                                          # biggest that fits
    floor_n = -(-_MIN_BLOCK_BYTES // plane_vmem_bytes)        # roofline floor
    steps_n = -(-N // _TARGET_GRID_STEPS)                     # tn giving ~8 steps
    tn = min(tn, max(steps_n, floor_n))                       # shrink only this far
    tn = max(1, min(tn, N, cap))
    if round_to > 1 and tn < N:
        # keep the sublane (second-minor) block dim legal: multiple of 8 or == N
        snapped = max(round_to, (tn // round_to) * round_to)
        tn = min(snapped, N, max(cap, round_to))
    return max(1, tn)


# ---------------------------------------------------------------------------
# Public wrapper
# ---------------------------------------------------------------------------
def gradient_layer(img):
    """Pallas GradientLayer.forward.  img: (N, H, W) -> (dx, dy), each (N, H, W).

    Output dtype follows the input (bf16 stays bf16 on the wire).  Math runs in
    f32, except bf16 inputs on v6e/v7x which compute in bf16 (packed VPU).
    """
    N, H, W = img.shape
    wire_dtype = img.dtype
    itemsize = jnp.dtype(wire_dtype).itemsize

    gen = _tpu_generation()
    compute_dtype = (jnp.bfloat16
                     if (wire_dtype == jnp.bfloat16 and gen >= 6)
                     else jnp.float32)

    # Generation-aware VMEM budget: scoped limit = half the physical VMEM; each
    # block may use ~1/12 of it (1 input + 2 output windows double-buffered = 6
    # block-sized buffers, plus ~4-5 block-sized in-kernel temporaries).
    vmem_limit = int(_vmem_capacity_bytes() // 2)
    block_budget = max(vmem_limit // 12, 64 * 1024)

    cparams = pltpu.CompilerParams(
        dimension_semantics=("parallel",),   # batch tiles shard over v7x's 2 TCs
        vmem_limit_bytes=vmem_limit,
    )

    # Decide layout: flatten onto the lane axis only when W is lane-sparse and the
    # flattened tiling stays legal (sublane block dim multiple of 8 or == N).
    use_flat = False
    if W < 128:
        P = H * W
        flat_plane = (-(-P // 128) * 128) * itemsize     # one image = one sublane row
        flat_cap = block_budget // max(flat_plane, 1)
        use_flat = (flat_cap >= 8) or (N <= flat_cap)

    if not use_flat:
        # Lane-dense (or fallback) 3-D layout with static-slice edge fix-ups.
        lanes = -(-W // 128) * 128
        sublanes = -(-H // 8) * 8
        plane_vmem = sublanes * lanes * itemsize
        tn = _choose_tile_n(N, plane_vmem, block_budget)
        spec = pl.BlockSpec((tn, H, W), lambda i: (i, 0, 0))
        out_sd = jax.ShapeDtypeStruct((N, H, W), wire_dtype)
        kernel = functools.partial(_grad_kernel_wide, compute_dtype=compute_dtype)
        return pl.pallas_call(
            kernel,
            out_shape=(out_sd, out_sd),
            grid=(pl.cdiv(N, tn),),
            in_specs=[spec],
            out_specs=(spec, spec),
            compiler_params=cparams,
        )(img)

    # W < 128: flatten each image onto the lane axis (free reshape of minor dims).
    P = H * W
    plane_vmem = (-(-P // 128) * 128) * itemsize
    tn = _choose_tile_n(N, plane_vmem, block_budget, round_to=8)
    spec = pl.BlockSpec((tn, P), lambda i: (i, 0))
    out_sd = jax.ShapeDtypeStruct((N, P), wire_dtype)
    kernel = functools.partial(_grad_kernel_flat, H=H, W=W,
                               compute_dtype=compute_dtype)
    dx, dy = pl.pallas_call(
        kernel,
        out_shape=(out_sd, out_sd),
        grid=(pl.cdiv(N, tn),),
        in_specs=[spec],
        out_specs=(spec, spec),
        compiler_params=cparams,
    )(img.reshape(N, P))
    return dx.reshape(N, H, W), dy.reshape(N, H, W)


# ---------------------------------------------------------------------------
# Pure-JAX reference (ReplicationPad2d + conv2d with [-0.5, 0, 0.5])
# ---------------------------------------------------------------------------
def _reference(img):
    img = img.astype(jnp.float32)
    padx = jnp.pad(img, ((0, 0), (0, 0), (1, 1)), mode="edge")
    dx = 0.5 * (padx[:, :, 2:] - padx[:, :, :-2])
    pady = jnp.pad(img, ((0, 0), (1, 1), (0, 0)), mode="edge")
    dy = 0.5 * (pady[:, 2:, :] - pady[:, :-2, :])
    return dx, dy


if __name__ == "__main__":
    key = jax.random.PRNGKey(0)
    k1, k2 = jax.random.split(key)

    # Case 1: module-like small shape (batch=2, 16x16) -> flattened lane-dense path.
    img_small = jax.random.normal(k1, (2, 16, 16), dtype=jnp.float32)
    dx, dy = gradient_layer(img_small)
    jax.block_until_ready((dx, dy))
    dx_r, dy_r = _reference(img_small)
    assert dx.shape == img_small.shape and dy.shape == img_small.shape
    assert jnp.allclose(dx, dx_r, atol=1e-6), "dx mismatch (flat path)"
    assert jnp.allclose(dy, dy_r, atol=1e-6), "dy mismatch (flat path)"

    # Case 2: lane-dense width (W >= 128) -> 3-D path with static edge fix-ups.
    img_wide = jax.random.normal(k2, (2, 8, 128), dtype=jnp.float32)
    dx2, dy2 = gradient_layer(img_wide)
    jax.block_until_ready((dx2, dy2))
    dx2_r, dy2_r = _reference(img_wide)
    assert jnp.allclose(dx2, dx2_r, atol=1e-6), "dx mismatch (wide path)"
    assert jnp.allclose(dy2, dy2_r, atol=1e-6), "dy mismatch (wide path)"

    # Case 3: bf16 wire dtype (bf16 math on v6e/v7x, f32 math elsewhere).
    img_bf16 = img_small.astype(jnp.bfloat16)
    dx3, dy3 = gradient_layer(img_bf16)
    jax.block_until_ready((dx3, dy3))
    dx3_r, dy3_r = _reference(img_bf16)   # f32 reference of the bf16-rounded input
    assert dx3.dtype == jnp.bfloat16 and dy3.dtype == jnp.bfloat16
    assert jnp.allclose(dx3.astype(jnp.float32), dx3_r, atol=0.1, rtol=0.05)
    assert jnp.allclose(dy3.astype(jnp.float32), dy3_r, atol=0.1, rtol=0.05)

    print("KERNEL_OK")
</pallas_src>

<mosaic_0001>
module attributes {stable_mosaic.version = 11 : i64} {
  func.func @_grad_kernel_flat(%arg0: i32, %arg1: memref<2x256xf32, #tpu.memory_space<vmem>>, %arg2: memref<2x256xf32, #tpu.memory_space<vmem>>, %arg3: memref<2x256xf32, #tpu.memory_space<vmem>>) attributes {dimension_semantics = [#tpu.dimension_semantics<parallel>], iteration_bounds = array<i64: 1>, scalar_prefetch = 0 : i64, scratch_operands = 0 : i64, tpu.core_type = #tpu.core_type<tc>, window_params = [{transform_indices = @transform_0, window_bounds = array<i64: 2, 256>}, {transform_indices = @transform_1, window_bounds = array<i64: 2, 256>}, {transform_indices = @transform_2, window_bounds = array<i64: 2, 256>}]} {
    %c0 = arith.constant 0 : index
    %c0_0 = arith.constant 0 : index
    %0 = vector.load %arg1[%c0, %c0_0] : memref<2x256xf32, #tpu.memory_space<vmem>>, vector<2x256xf32>
    %1 = tpu.iota {dimensions = array<i32: 1>} : vector<2x256xi32>
    %c15_i32 = arith.constant 15 : i32
    %2 = vector.broadcast %c15_i32 : i32 to vector<2x256xi32>
    %3 = arith.andi %1, %2 : vector<2x256xi32>
    %c1_i32 = arith.constant 1 : i32
    %4 = tpu.dynamic_rotate %0 by %c1_i32 dim 1 : vector<2x256xf32>, i32 -> vector<2x256xf32>
    %c255_i32 = arith.constant 255 : i32
    %5 = tpu.dynamic_rotate %0 by %c255_i32 dim 1 : vector<2x256xf32>, i32 -> vector<2x256xf32>
    %c0_i32 = arith.constant 0 : i32
    %6 = vector.broadcast %c0_i32 : i32 to vector<2x256xi32>
    %7 = arith.cmpi eq, %3, %6 : vector<2x256xi32>
    %8 = arith.select %7, %0, %4 : vector<2x256xi1>, vector<2x256xf32>
    %c15_i32_1 = arith.constant 15 : i32
    %9 = vector.broadcast %c15_i32_1 : i32 to vector<2x256xi32>
    %10 = arith.cmpi eq, %3, %9 : vector<2x256xi32>
    %11 = arith.select %10, %0, %5 : vector<2x256xi1>, vector<2x256xf32>
    %12 = arith.subf %11, %8 : vector<2x256xf32>
    %cst = arith.constant 5.000000e-01 : f32
    %13 = vector.broadcast %cst : f32 to vector<2x256xf32>
    %14 = arith.mulf %13, %12 : vector<2x256xf32>
    %c0_2 = arith.constant 0 : index
    %c0_3 = arith.constant 0 : index
    %15 = vector.load %arg2[%c0_2, %c0_3] : memref<2x256xf32, #tpu.memory_space<vmem>>, vector<2x256xf32>
    tpu.vector_store %arg2[%c0_2, %c0_3], %14 {strides = array<i32>} : memref<2x256xf32, #tpu.memory_space<vmem>>, vector<2x256xf32>,
    %c16_i32 = arith.constant 16 : i32
    %16 = tpu.dynamic_rotate %0 by %c16_i32 dim 1 : vector<2x256xf32>, i32 -> vector<2x256xf32>
    %c240_i32 = arith.constant 240 : i32
    %17 = tpu.dynamic_rotate %0 by %c240_i32 dim 1 : vector<2x256xf32>, i32 -> vector<2x256xf32>
    %c16_i32_4 = arith.constant 16 : i32
    %18 = vector.broadcast %c16_i32_4 : i32 to vector<2x256xi32>
    %19 = arith.cmpi slt, %1, %18 : vector<2x256xi32>
    %20 = arith.select %19, %0, %16 : vector<2x256xi1>, vector<2x256xf32>
    %c240_i32_5 = arith.constant 240 : i32
    %21 = vector.broadcast %c240_i32_5 : i32 to vector<2x256xi32>
    %22 = arith.cmpi sge, %1, %21 : vector<2x256xi32>
    %23 = arith.select %22, %0, %17 : vector<2x256xi1>, vector<2x256xf32>
    %24 = arith.subf %23, %20 : vector<2x256xf32>
    %cst_6 = arith.constant 5.000000e-01 : f32
    %25 = vector.broadcast %cst_6 : f32 to vector<2x256xf32>
    %26 = arith.mulf %25, %24 : vector<2x256xf32>
    %c0_7 = arith.constant 0 : index
    %c0_8 = arith.constant 0 : index
    %27 = vector.load %arg3[%c0_7, %c0_8] : memref<2x256xf32, #tpu.memory_space<vmem>>, vector<2x256xf32>
    tpu.vector_store %arg3[%c0_7, %c0_8], %26 {strides = array<i32>} : memref<2x256xf32, #tpu.memory_space<vmem>>, vector<2x256xf32>,
    return
  }
  func.func @transform_0(%arg0: i32) -> (i32, i32) {
    %c0_i32 = arith.constant 0 : i32
    %c0_i32_0 = arith.constant 0 : i32
    return %arg0, %c0_i32 : i32, i32
  }
  func.func @transform_1(%arg0: i32) -> (i32, i32) {
    %c0_i32 = arith.constant 0 : i32
    %c0_i32_0 = arith.constant 0 : i32
    return %arg0, %c0_i32 : i32, i32
  }
  func.func @transform_2(%arg0: i32) -> (i32, i32) {
    %c0_i32 = arith.constant 0 : i32
    %c0_i32_0 = arith.constant 0 : i32
    return %arg0, %c0_i32 : i32, i32
  }
}

</mosaic_0001>

<llo_original>
// kernel: tpu_custom_call.1
$region0: #{tpu_custom_call.1}
  #allocation0 [shape = 'u32[]', space=smem, size = 0x4, offset = 0x4, fixed_abs, tag = 'smem constant byte address 0x4 - core index']
  #allocation1 [shape = 'u32[144,128]{1,0:T(1,128)}', space=vmem, size = 0x12000, scoped, tag = 'internal scratch']
  %s0 = inlined_call_operand.hbm [shape: f32[2,256], index: 0, kind: input, shape index: {}]
  %s1 = inlined_call_operand.hbm [shape: f32[2,256], index: 1, kind: output, shape index: {0}]
  %s2 = inlined_call_operand.hbm [shape: f32[2,256], index: 2, kind: output, shape index: {1}]
  %3 = xla_tuple %s1, %s2
  %s4 = sld [smem:[#allocation0]]
  $region26: #{tpu_custom_call.1} parent=0
    _
  %s6 = ssub.s32 1, %s4
  %s7 = scalar_select 0, %s6, %s4
  $region1: #{tpu_custom_call.1} parent=0
    #allocation2 [shape = 'u8[2048]{0}', space=vmem, size = 0x800, scoped, tag = 'input window, operand 0, single buffered']
    #allocation3 [shape = 's32[1]{0}', space=sflag, size = 0x4, scoped, tag = 'scoped memory for tpu_custom_call.1']
    #allocation4 [shape = 's32[1]{0}', space=sflag, size = 0x4, scoped, tag = 'scoped memory for tpu_custom_call.1']
    #allocation5 [shape = 'u8[2048]{0}', space=vmem, size = 0x800, scoped, tag = 'output window, operand 0, single buffered']
    #allocation6 [shape = 'u8[2048]{0}', space=vmem, size = 0x800, scoped, tag = 'output window, operand 1, single buffered']
    #allocation7 [shape = 's32[1]{0}', space=sflag, size = 0x4, scoped, tag = 'scoped memory for tpu_custom_call.1']
    %8 = vsyncpa [#allocation3], 0
    %9 = vsyncpa [#allocation4], 0
    %10 = vsyncpa [#allocation7], 0
    // Predicated region
    $region2: #{tpu_custom_call.1} parent=1 // pred_check
      _
    $region3: #{tpu_custom_call.1} parent=1 // pred_check_branch
      %12 = sbr.rel (0) target = $region5
    $region4: #{tpu_custom_call.1} parent=1 // pred_region
      %s14 = ssub.s32 64, 64
      %15 = vsyncadd [#allocation3], %s14
      %s17 = sshll.u32 [#allocation2], 4
      %s18 = int_to_ptr.vmem [resolvable:$true] %s17
      %20 = dma.hbm_to_vmem [thread:$0]  %s0, 64, %s18, [#allocation3]
    $region5: #{tpu_custom_call.1} parent=1 // pred_fallthru
      _
    // Predicated region
    $region6: #{tpu_custom_call.1} parent=1 // pred_check
      _
    $region7: #{tpu_custom_call.1} parent=1 // pred_check_branch
      %22 = sbr.rel (0) target = $region9
    $region8: #{tpu_custom_call.1} parent=1 // pred_region
      %23 = dma.done [#allocation3], 64
    $region9: #{tpu_custom_call.1} parent=1 // pred_fallthru
      _
    %v24 = vld [vmem:[#allocation2] sm:$0xf]
    %v25 = vlaneseq
    %v26 = vand.u32 %v25, 127
    %v27 = vadd.s32 %v26, 128
    %v28 = vand.u32 %v26, 15
    %v29 = vand.u32 %v27, 15
    %v32 = vunpack.c.l.s4 1983009808
    %v33 = vunpack.c.0.s8 %v32
    %v34 = vlaneseq
    %v35 = vshrl.u32 %v34, 7
    %v36 = vsub.s32 %v33, %v35
    %v37 = vrot.slane %v24, %v36
    %v38 = vcombine.high %v37, %v37
    %41 = vrot.lane.b32.xlu0 %v37, 1
    %v42 = vpop.permute.xlu0 %41
    %43 = vrot.lane.b32.xlu0 %v38, 1
    %v44 = vpop.permute.xlu0 %43
    %vm45 = vcmp.lt.s32.totalorder %v26, 1
    %v46 = vsel %vm45, %v42, %v44
    %v47 = vsel %vm45, %v44, %v42
    %48 = vrot.lane.b32.xlu0 %v37, 127
    %v49 = vpop.permute.xlu0 %48
    %50 = vrot.lane.b32.xlu0 %v38, 127
    %v51 = vpop.permute.xlu0 %50
    %vm52 = vcmp.lt.s32.totalorder %v26, 127
    %v53 = vsel %vm52, %v49, %v51
    %v54 = vsel %vm52, %v51, %v49
    %vm55 = vcmp.eq.s32.totalorder %v28, 0
    %vm56 = vcmp.eq.s32.totalorder %v29, 0
    %v57 = vsel %vm55, %v37, %v47
    %v58 = vsel %vm56, %v38, %v46
    %vm59 = vcmp.eq.s32.totalorder %v28, 15
    %vm60 = vcmp.eq.s32.totalorder %v29, 15
    %v61 = vsel %vm59, %v37, %v53
    %v62 = vsel %vm60, %v38, %v54
    %v63 = vsub.f32 %v61, %v57
    %v64 = vsub.f32 %v62, %v58
    %v65 = vmul.f32 %v63, 0.5
    %v66 = vmul.f32 %v64, 0.5
    %v69 = vcombine.low %v65, %v66
    %v71 = vunpack.c.l.s4 1983009808
    %v72 = vunpack.c.0.s8 %v71
    %v73 = vlaneseq
    %v74 = vshrl.u32 %v73, 7
    %v75 = vsub.s32 %v72, %v74
    %v76 = vrot.slane %v69, %v75
    %78 = vst [vmem:[#allocation5] sm:$0xf] %v76
    %79 = vrot.lane.b32.xlu0 %v37, 16
    %v80 = vpop.permute.xlu0 %79
    %81 = vrot.lane.b32.xlu0 %v38, 16
    %v82 = vpop.permute.xlu0 %81
    %vm83 = vcmp.lt.s32.totalorder %v26, 16
    %v84 = vsel %vm83, %v80, %v82
    %v85 = vsel %vm83, %v82, %v80
    %86 = vrot.lane.b32.xlu0 %v37, 112
    %v87 = vpop.permute.xlu0 %86
    %88 = vrot.lane.b32.xlu0 %v38, 112
    %v89 = vpop.permute.xlu0 %88
    %vm90 = vcmp.lt.s32.totalorder %v26, 112
    %v91 = vsel %vm90, %v87, %v89
    %v92 = vsel %vm90, %v89, %v87
    %vm93 = vcmp.lt.s32.totalorder %v27, 16
    %v94 = vsel %vm83, %v37, %v85
    %v95 = vsel %vm93, %v38, %v84
    %vm96 = vcmp.ge.s32.totalorder %v26, 240
    %vm97 = vcmp.ge.s32.totalorder %v27, 240
    %v98 = vsel %vm96, %v37, %v91
    %v99 = vsel %vm97, %v38, %v92
    %v100 = vsub.f32 %v98, %v94
    %v101 = vsub.f32 %v99, %v95
    %v102 = vmul.f32 %v100, 0.5
    %v103 = vmul.f32 %v101, 0.5
    %v106 = vcombine.low %v102, %v103
    %v108 = vunpack.c.l.s4 1983009808
    %v109 = vunpack.c.0.s8 %v108
    %v110 = vlaneseq
    %v111 = vshrl.u32 %v110, 7
    %v112 = vsub.s32 %v109, %v111
    %v113 = vrot.slane %v106, %v112
    %115 = vst [vmem:[#allocation6] sm:$0xf] %v113
    // Predicated region
    $region10: #{tpu_custom_call.1} parent=1 // pred_check
      _
    $region11: #{tpu_custom_call.1} parent=1 // pred_check_branch
      %117 = sbr.rel (0) target = $region13
    $region12: #{tpu_custom_call.1} parent=1 // pred_region
      %s119 = ssub.s32 64, 64
      %120 = vsyncadd [#allocation4], %s119
      %s122 = sshll.u32 [#allocation5], 4
      %s123 = int_to_ptr.vmem [resolvable:$true] %s122
      %125 = dma.vmem_to_hbm [thread:$0]  %s123, 64, %s1, [#allocation4]
    $region13: #{tpu_custom_call.1} parent=1 // pred_fallthru
      _
    // Predicated region
    $region14: #{tpu_custom_call.1} parent=1 // pred_check
      _
    $region15: #{tpu_custom_call.1} parent=1 // pred_check_branch
      %127 = sbr.rel (0) target = $region17
    $region16: #{tpu_custom_call.1} parent=1 // pred_region
      %s129 = ssub.s32 64, 64
      %130 = vsyncadd [#allocation7], %s129
      %s132 = sshll.u32 [#allocation6], 4
      %s133 = int_to_ptr.vmem [resolvable:$true] %s132
      %135 = dma.vmem_to_hbm [thread:$0]  %s133, 64, %s2, [#allocation7]
    $region17: #{tpu_custom_call.1} parent=1 // pred_fallthru
      _
    // Predicated region
    $region18: #{tpu_custom_call.1} parent=1 // pred_check
      _
    $region19: #{tpu_custom_call.1} parent=1 // pred_check_branch
      %137 = sbr.rel (0) target = $region21
    $region20: #{tpu_custom_call.1} parent=1 // pred_region
      %138 = dma.done [#allocation4], 64
    $region21: #{tpu_custom_call.1} parent=1 // pred_fallthru
      _
    // Predicated region
    $region22: #{tpu_custom_call.1} parent=1 // pred_check
      _
    $region23: #{tpu_custom_call.1} parent=1 // pred_check_branch
      %140 = sbr.rel (0) target = $region25
    $region24: #{tpu_custom_call.1} parent=1 // pred_region
      %141 = dma.done [#allocation7], 64
    $region25: #{tpu_custom_call.1} parent=1 // pred_fallthru
      _
    %142 = vsyncpa [#allocation3], 1
    %143 = vsyncpa [#allocation4], 1
    %144 = vsyncpa [#allocation7], 1

</llo_original>
